<compile_context>
chip_gen: v5e
topology: v5e:2x2
jax: 0.10.0
libtpu: 0.0.40
codegen_flags: <defaults>
</compile_context>

<pallas_src>
import functools
from math import sqrt

import jax
import jax.numpy as jnp
from jax.experimental import pallas as pl
from jax.experimental.pallas import tpu as pltpu


def _mlp_kernel(x_ref, w1_ref, b1_ref, w2_ref, b2_ref, w3_ref, b3_ref, o_ref):
    # x_ref: (isize, tb) bf16 -- batch on lanes.
    x = x_ref[...]

    # Linear(isize -> 64) + ReLU: bf16 x bf16 -> f32 accumulate, f32 bias column.
    h1 = jnp.dot(w1_ref[...], x, preferred_element_type=jnp.float32)
    h1 = jnp.maximum(h1 + b1_ref[...], 0.0)                     # (64, tb) f32

    # Linear(64 -> 32) + ReLU.
    h2 = jnp.dot(w2_ref[...], h1.astype(jnp.bfloat16),
                 preferred_element_type=jnp.float32)
    h2 = jnp.maximum(h2 + b2_ref[...], 0.0)                     # (32, tb) f32

    # Linear(32 -> 1): VPU multiply + sublane reduce (keeps an N=1 column off
    # the MXU).  w3 is an f32 (32, 1) column; b3 is a single SMEM scalar.
    z = jnp.sum(h2 * w3_ref[...], axis=0, keepdims=True) + b3_ref[0]

    o_ref[...] = jax.nn.sigmoid(z).astype(o_ref.dtype)          # (1, tb): lane-dense


def _vmem_budgets():
    """(per-step tile budget, scoped VMEM limit) per TPU generation."""
    try:
        cap = pltpu.get_tpu_info().vmem_capacity_bytes
    except Exception:            # unknown / query failed: assume small (v7x) VMEM
        cap = 64 * 1024 * 1024
    if cap >= 96 * 1024 * 1024:                      # v5e / v6e: 128 MiB physical
        return 40 * 1024 * 1024, 96 * 1024 * 1024
    return 22 * 1024 * 1024, 48 * 1024 * 1024        # v7x: 64 MiB per TensorCore


def _ceil_to(v, m):
    return -(-v // m) * m


def _pick_batch_tile(B, isize, block_b, budget_bytes):
    """Largest lane-dense batch tile within the VMEM budget, preferring an even
    grid-step count (balances v7x's two TensorCores; no effect on v5e/v6e)."""
    # Live VMEM bytes per batch lane: 2 bf16 x buffers + h1 (f32 + bf16 copy)
    # + h2 f32 + double-buffered output row + slack for compiler temporaries.
    per_lane = 2 * 2 * isize + (4 + 2) * 64 + 4 * 32 + 2 * 4 + 48
    tb = min(block_b, max(128, budget_bytes // per_lane))
    if tb >= B:
        if B < 1024:
            return B                                  # single full-extent block
        tb = _ceil_to(-(-B // 2), 128)    # split so both v7x TCs get a grid step
    else:
        tb = max(128, (tb // 128) * 128)  # tiled path: lane dim must be 128-multiple
    # Take the largest 128-multiple <= tb with an even step count, else keep tb.
    for cand in range(tb, max(127, tb // 2), -128):
        if (-(-B // cand)) % 2 == 0:
            return cand
    return tb


@functools.partial(jax.jit, static_argnames=("block_b",))
def network_forward_xt(xt, params, block_b=32768):
    """Forward pass for callers that already hold x as (isize, B) bf16
    (review option (a)): no wrapper-side layout pass at all."""
    isize, B = xt.shape
    w1 = params["w1"].astype(jnp.bfloat16)      # (64, isize)
    w2 = params["w2"].astype(jnp.bfloat16)      # (32, 64)
    b1, b2 = params["b1"], params["b2"]         # (64, 1), (32, 1) f32
    w3, b3 = params["w3"], params["b3"]         # (32, 1), (1,)   f32

    budget, vmem_limit = _vmem_budgets()
    tb = _pick_batch_tile(B, isize, block_b, budget)
    grid = (pl.cdiv(B, tb),)

    out = pl.pallas_call(
        _mlp_kernel,
        out_shape=jax.ShapeDtypeStruct((1, B), jnp.float32),
        grid_spec=pltpu.PrefetchScalarGridSpec(
            num_scalar_prefetch=0,
            grid=grid,
            in_specs=[
                pl.BlockSpec((isize, tb), lambda i: (0, i)),   # x^T: tiled over batch lanes
                pl.BlockSpec(w1.shape, lambda i: (0, 0)),      # constant-index weights:
                pl.BlockSpec(b1.shape, lambda i: (0, 0)),      #   fetched once, resident
                pl.BlockSpec(w2.shape, lambda i: (0, 0)),
                pl.BlockSpec(b2.shape, lambda i: (0, 0)),
                pl.BlockSpec(w3.shape, lambda i: (0, 0)),
                pl.BlockSpec(memory_space=pltpu.MemorySpace.SMEM),  # b3 scalar
            ],
            out_specs=pl.BlockSpec((1, tb), lambda i: (0, i)),  # lane-dense output slab
        ),
        compiler_params=pltpu.CompilerParams(
            dimension_semantics=("parallel",),
            vmem_limit_bytes=vmem_limit,
        ),
    )(xt, w1, b1, w2, b2, w3, b3)

    return out.reshape(B, 1)          # metadata-only reshape of the (1, B) row


@functools.partial(jax.jit, static_argnames=("block_b",))
def network_forward(x, params, block_b=32768):
    """x: (B, isize) f32 (PyTorch layout). Returns (B, 1) f32 probabilities."""
    # Single fused cast+transpose pass over x (the only wrapper-side HBM
    # traffic); everything else runs inside the Pallas kernel.
    xt = x.astype(jnp.bfloat16).T                 # (isize, B) bf16
    return network_forward_xt(xt, params, block_b=block_b)


def init_params(key, isize):
    """Deterministic init mimicking PyTorch nn.Linear default
    (uniform in [-1/sqrt(fan_in), 1/sqrt(fan_in)]).  Weights in PyTorch
    (out, in) layout; biases as (out, 1) columns; w3 as a (32, 1) column and
    b3 as a (1,) scalar for the kernel."""
    def linear(key, fan_in, fan_out):
        kw, kb = jax.random.split(key)
        bound = 1.0 / sqrt(fan_in)
        w = jax.random.uniform(kw, (fan_out, fan_in), jnp.float32, -bound, bound)
        b = jax.random.uniform(kb, (fan_out, 1), jnp.float32, -bound, bound)
        return w, b

    k1, k2, k3 = jax.random.split(key, 3)
    w1, b1 = linear(k1, isize, 64)
    w2, b2 = linear(k2, 64, 32)
    w3, b3 = linear(k3, 32, 1)            # w3: (1, 32), b3: (1, 1)
    return {"w1": w1, "b1": b1,
            "w2": w2, "b2": b2,
            "w3": w3.T,                   # (32, 1) column
            "b3": b3.reshape(1)}          # (1,) SMEM scalar


def _reference_forward(x, p):
    """Pure-JAX f32 reference matching the PyTorch forward."""
    h1 = jnp.maximum(x @ p["w1"].T + p["b1"][:, 0], 0.0)
    h2 = jnp.maximum(h1 @ p["w2"].T + p["b2"][:, 0], 0.0)
    z = h2 @ p["w3"] + p["b3"]
    return jax.nn.sigmoid(z)


if __name__ == "__main__":
    key = jax.random.PRNGKey(0)
    k_params, k_x, k_x2 = jax.random.split(key, 3)

    B, ISIZE = 8, 16                      # small shapes consistent with forward()
    params = init_params(k_params, ISIZE)
    x = jax.random.normal(k_x, (B, ISIZE), jnp.float32)

    out = jax.block_until_ready(network_forward(x, params))
    ref = _reference_forward(x, params)
    assert out.shape == (B, 1)
    # bf16 matmul inputs (f32 accumulation) -> loosened tolerance vs f32 reference.
    assert jnp.allclose(out, ref, atol=5e-3), "mismatch vs reference (small case)"

    # Exercise the tiled multi-step path (even grid, lane-dense output blocks).
    B2 = 512
    x2 = jax.random.normal(k_x2, (B2, ISIZE), jnp.float32)
    out2 = jax.block_until_ready(network_forward(x2, params, block_b=128))
    ref2 = _reference_forward(x2, params)
    assert out2.shape == (B2, 1)
    assert jnp.allclose(out2, ref2, atol=5e-3), "mismatch vs reference (tiled case)"

    print("KERNEL_OK")
</pallas_src>

<mosaic_0001>
module attributes {stable_mosaic.version = 11 : i64} {
  func.func @_mlp_kernel(%arg0: i32, %arg1: memref<16x8xbf16, #tpu.memory_space<vmem>>, %arg2: memref<64x16xbf16, #tpu.memory_space<vmem>>, %arg3: memref<64x1xf32, #tpu.memory_space<vmem>>, %arg4: memref<32x64xbf16, #tpu.memory_space<vmem>>, %arg5: memref<32x1xf32, #tpu.memory_space<vmem>>, %arg6: memref<32x1xf32, #tpu.memory_space<vmem>>, %arg7: memref<1xf32, #tpu.memory_space<smem>>, %arg8: memref<1x8xf32, #tpu.memory_space<vmem>>) attributes {dimension_semantics = [#tpu.dimension_semantics<parallel>], iteration_bounds = array<i64: 1>, scalar_prefetch = 0 : i64, scratch_operands = 0 : i64, tpu.core_type = #tpu.core_type<tc>, window_params = [{transform_indices = @transform_0, window_bounds = array<i64: 16, 8>}, {pipeline_mode = #tpu.pipeline_mode<synchronous>, transform_indices = @transform_1, window_bounds = array<i64: 64, 16>}, {pipeline_mode = #tpu.pipeline_mode<synchronous>, transform_indices = @transform_2, window_bounds = array<i64: 64, 1>}, {pipeline_mode = #tpu.pipeline_mode<synchronous>, transform_indices = @transform_3, window_bounds = array<i64: 32, 64>}, {pipeline_mode = #tpu.pipeline_mode<synchronous>, transform_indices = @transform_4, window_bounds = array<i64: 32, 1>}, {pipeline_mode = #tpu.pipeline_mode<synchronous>, transform_indices = @transform_5, window_bounds = array<i64: 32, 1>}, {transform_indices = @transform_6, window_bounds = array<i64: 1>}, {transform_indices = @transform_7, window_bounds = array<i64: 1, 8>}]} {
    %c0 = arith.constant 0 : index
    %c0_0 = arith.constant 0 : index
    %0 = vector.load %arg1[%c0, %c0_0] : memref<16x8xbf16, #tpu.memory_space<vmem>>, vector<16x8xbf16>
    %c0_1 = arith.constant 0 : index
    %c0_2 = arith.constant 0 : index
    %1 = vector.load %arg2[%c0_1, %c0_2] : memref<64x16xbf16, #tpu.memory_space<vmem>>, vector<64x16xbf16>
    %cst = arith.constant dense<0.000000e+00> : vector<64x8xf32>
    %2 = tpu.matmul %1, %0, %cst {dimension_numbers = #tpu.dot_dimension_numbers<[1], [0], [0], [1], [0, 0, 1, 1], [], []>} : vector<64x16xbf16>, vector<16x8xbf16>, vector<64x8xf32> -> vector<64x8xf32>
    %c0_3 = arith.constant 0 : index
    %c0_4 = arith.constant 0 : index
    %3 = vector.load %arg3[%c0_3, %c0_4] : memref<64x1xf32, #tpu.memory_space<vmem>>, vector<64x1xf32>
    %4 = vector.broadcast %3 : vector<64x1xf32> to vector<64x8xf32>
    %5 = arith.addf %2, %4 : vector<64x8xf32>
    %cst_5 = arith.constant 0.000000e+00 : f32
    %6 = vector.broadcast %cst_5 : f32 to vector<64x8xf32>
    %7 = arith.maximumf %5, %6 : vector<64x8xf32>
    %c0_6 = arith.constant 0 : index
    %c0_7 = arith.constant 0 : index
    %8 = vector.load %arg4[%c0_6, %c0_7] : memref<32x64xbf16, #tpu.memory_space<vmem>>, vector<32x64xbf16>
    %9 = arith.truncf %7 : vector<64x8xf32> to vector<64x8xbf16>
    %cst_8 = arith.constant dense<0.000000e+00> : vector<32x8xf32>
    %10 = tpu.matmul %8, %9, %cst_8 {dimension_numbers = #tpu.dot_dimension_numbers<[1], [0], [0], [1], [0, 0, 1, 1], [], []>} : vector<32x64xbf16>, vector<64x8xbf16>, vector<32x8xf32> -> vector<32x8xf32>
    %c0_9 = arith.constant 0 : index
    %c0_10 = arith.constant 0 : index
    %11 = vector.load %arg5[%c0_9, %c0_10] : memref<32x1xf32, #tpu.memory_space<vmem>>, vector<32x1xf32>
    %12 = vector.broadcast %11 : vector<32x1xf32> to vector<32x8xf32>
    %13 = arith.addf %10, %12 : vector<32x8xf32>
    %cst_11 = arith.constant 0.000000e+00 : f32
    %14 = vector.broadcast %cst_11 : f32 to vector<32x8xf32>
    %15 = arith.maximumf %13, %14 : vector<32x8xf32>
    %c0_12 = arith.constant 0 : index
    %c0_13 = arith.constant 0 : index
    %16 = vector.load %arg6[%c0_12, %c0_13] : memref<32x1xf32, #tpu.memory_space<vmem>>, vector<32x1xf32>
    %17 = vector.broadcast %16 : vector<32x1xf32> to vector<32x8xf32>
    %18 = arith.mulf %15, %17 : vector<32x8xf32>
    %cst_14 = arith.constant dense<0.000000e+00> : vector<8xf32>
    %19 = vector.multi_reduction <add>, %18, %cst_14 [0] : vector<32x8xf32> to vector<8xf32>
    %20 = vector.shape_cast %19 : vector<8xf32> to vector<1x8xf32>
    %c0_15 = arith.constant 0 : index
    %21 = memref.load %arg7[%c0_15] : memref<1xf32, #tpu.memory_space<smem>>
    %22 = vector.broadcast %21 : f32 to vector<1x8xf32>
    %23 = arith.addf %20, %22 : vector<1x8xf32>
    %24 = arith.negf %23 : vector<1x8xf32>
    %25 = math.exp %24 : vector<1x8xf32>
    %cst_16 = arith.constant 1.000000e+00 : f32
    %26 = vector.broadcast %cst_16 : f32 to vector<1x8xf32>
    %27 = arith.addf %26, %25 : vector<1x8xf32>
    %28 = arith.divf %26, %27 : vector<1x8xf32>
    %c0_17 = arith.constant 0 : index
    %c0_18 = arith.constant 0 : index
    %29 = vector.load %arg8[%c0_17, %c0_18] : memref<1x8xf32, #tpu.memory_space<vmem>>, vector<1x8xf32>
    tpu.vector_store %arg8[%c0_17, %c0_18], %28 {strides = array<i32>} : memref<1x8xf32, #tpu.memory_space<vmem>>, vector<1x8xf32>,
    return
  }
  func.func @transform_0(%arg0: i32) -> (i32, i32) {
    %c0_i32 = arith.constant 0 : i32
    %c0_i32_0 = arith.constant 0 : i32
    return %c0_i32, %arg0 : i32, i32
  }
  func.func @transform_1(%arg0: i32) -> (i32, i32) {
    %c0_i32 = arith.constant 0 : i32
    %c0_i32_0 = arith.constant 0 : i32
    %c0_i32_1 = arith.constant 0 : i32
    return %c0_i32, %c0_i32_0 : i32, i32
  }
  func.func @transform_2(%arg0: i32) -> (i32, i32) {
    %c0_i32 = arith.constant 0 : i32
    %c0_i32_0 = arith.constant 0 : i32
    %c0_i32_1 = arith.constant 0 : i32
    return %c0_i32, %c0_i32_0 : i32, i32
  }
  func.func @transform_3(%arg0: i32) -> (i32, i32) {
    %c0_i32 = arith.constant 0 : i32
    %c0_i32_0 = arith.constant 0 : i32
    %c0_i32_1 = arith.constant 0 : i32
    return %c0_i32, %c0_i32_0 : i32, i32
  }
  func.func @transform_4(%arg0: i32) -> (i32, i32) {
    %c0_i32 = arith.constant 0 : i32
    %c0_i32_0 = arith.constant 0 : i32
    %c0_i32_1 = arith.constant 0 : i32
    return %c0_i32, %c0_i32_0 : i32, i32
  }
  func.func @transform_5(%arg0: i32) -> (i32, i32) {
    %c0_i32 = arith.constant 0 : i32
    %c0_i32_0 = arith.constant 0 : i32
    %c0_i32_1 = arith.constant 0 : i32
    return %c0_i32, %c0_i32_0 : i32, i32
  }
  func.func @transform_6(%arg0: i32) -> i32 {
    %c0_i32 = arith.constant 0 : i32
    %c0_i32_0 = arith.constant 0 : i32
    return %c0_i32 : i32
  }
  func.func @transform_7(%arg0: i32) -> (i32, i32) {
    %c0_i32 = arith.constant 0 : i32
    %c0_i32_0 = arith.constant 0 : i32
    return %c0_i32, %arg0 : i32, i32
  }
}

</mosaic_0001>

<llo_original>
// kernel: network_forward_xt.1
$region0: #{network_forward_xt.1}
  #allocation0 [shape = 'u32[]', space=smem, size = 0x4, offset = 0x4, fixed_abs, tag = 'smem constant byte address 0x4 - core index']
  #allocation1 [shape = 'u32[72,128]{1,0:T(1,128)}', space=vmem, size = 0x9000, scoped, tag = 'internal scratch']
  #allocation2 [shape = 'f32[1]{0:T(128)S(6)}', space=smem, size = 0x200, scoped, tag = 'scoped memory for network_forward_xt.1']
  %s0 = inlined_call_operand.vmem [shape: bf16[16,8], index: 0, kind: input, shape index: {}]
  %s1 = inlined_call_operand.vmem [shape: bf16[64,16], index: 1, kind: input, shape index: {}]
  %s2 = inlined_call_operand.vmem [shape: f32[64,1], index: 2, kind: input, shape index: {}]
  %s3 = inlined_call_operand.vmem [shape: bf16[32,64], index: 3, kind: input, shape index: {}]
  %s4 = inlined_call_operand.vmem [shape: f32[32,1], index: 4, kind: input, shape index: {}]
  %s5 = inlined_call_operand.vmem [shape: f32[32,1], index: 5, kind: input, shape index: {}]
  %s6 = inlined_call_operand.<no memory space> [shape: f32[1], index: 6, kind: input, shape index: {}]
  %s7 = inlined_call_operand.hbm [shape: f32[1,8], index: 7, kind: output, shape index: {}]
  %s8 = sld [smem:[#allocation0]]
  $region38: #{network_forward_xt.1} parent=0
    _
  %s10 = ssub.s32 1, %s8
  %s11 = scalar_select 0, %s10, %s8
  %12 = sst [smem:[#allocation2]] %s6
  $region1: #{network_forward_xt.1} parent=0
    #allocation3 [shape = 'u8[512]{0}', space=vmem, size = 0x400, scoped, tag = 'output window, operand 0, single buffered']
    #allocation4 [shape = 's32[1]{0}', space=sflag, size = 0x4, scoped, tag = 'scoped memory for network_forward_xt.1']
    %13 = vsyncpa [#allocation4], 0
    // Predicated region
    $region2: #{network_forward_xt.1} parent=1 // pred_check
      _
    $region3: #{network_forward_xt.1} parent=1 // pred_check_branch
      %15 = sbr.rel (0) target = $region5
    $region4: #{network_forward_xt.1} parent=1 // pred_region
      _
    $region5: #{network_forward_xt.1} parent=1 // pred_fallthru
      _
    // Predicated region
    $region6: #{network_forward_xt.1} parent=1 // pred_check
      _
    $region7: #{network_forward_xt.1} parent=1 // pred_check_branch
      %17 = sbr.rel (0) target = $region9
    $region8: #{network_forward_xt.1} parent=1 // pred_region
      _
    $region9: #{network_forward_xt.1} parent=1 // pred_fallthru
      _
    // Predicated region
    $region10: #{network_forward_xt.1} parent=1 // pred_check
      _
    $region11: #{network_forward_xt.1} parent=1 // pred_check_branch
      %19 = sbr.rel (0) target = $region13
    $region12: #{network_forward_xt.1} parent=1 // pred_region
      _
    $region13: #{network_forward_xt.1} parent=1 // pred_fallthru
      _
    // Predicated region
    $region14: #{network_forward_xt.1} parent=1 // pred_check
      _
    $region15: #{network_forward_xt.1} parent=1 // pred_check_branch
      %21 = sbr.rel (0) target = $region17
    $region16: #{network_forward_xt.1} parent=1 // pred_region
      _
    $region17: #{network_forward_xt.1} parent=1 // pred_fallthru
      _
    // Predicated region
    $region18: #{network_forward_xt.1} parent=1 // pred_check
      _
    $region19: #{network_forward_xt.1} parent=1 // pred_check_branch
      %23 = sbr.rel (0) target = $region21
    $region20: #{network_forward_xt.1} parent=1 // pred_region
      _
    $region21: #{network_forward_xt.1} parent=1 // pred_fallthru
      _
    // Predicated region
    $region22: #{network_forward_xt.1} parent=1 // pred_check
      _
    $region23: #{network_forward_xt.1} parent=1 // pred_check_branch
      %25 = sbr.rel (0) target = $region25
    $region24: #{network_forward_xt.1} parent=1 // pred_region
      _
    $region25: #{network_forward_xt.1} parent=1 // pred_fallthru
      _
    // Predicated region
    $region26: #{network_forward_xt.1} parent=1 // pred_check
      _
    $region27: #{network_forward_xt.1} parent=1 // pred_check_branch
      %27 = sbr.rel (0) target = $region29
    $region28: #{network_forward_xt.1} parent=1 // pred_region
      _
    $region29: #{network_forward_xt.1} parent=1 // pred_fallthru
      _
    %v29 = vld [vmem:[%s0] sm:$0xf]
    %v30 = vld [vmem:[%s0 + $0x4] sm:$0xf]
    %v31 = vld [vmem:[%s1] sm:$0xf]
    %v32 = vld [vmem:[%s1 + $0x4] sm:$0xf]
    %v33 = vld [vmem:[%s1 + $0x8] sm:$0xf]
    %v34 = vld [vmem:[%s1 + $0xc] sm:$0xf]
    %v35 = vld [vmem:[%s1 + $0x10] sm:$0xf]
    %v36 = vld [vmem:[%s1 + $0x14] sm:$0xf]
    %v37 = vld [vmem:[%s1 + $0x18] sm:$0xf]
    %v38 = vld [vmem:[%s1 + $0x1c] sm:$0xf]
    %v39 = vld [vmem:[%s2] sm:$0xff]
    %v40 = vld [vmem:[%s2 + $0x8] sm:$0xff]
    %v41 = vld [vmem:[%s2 + $0x10] sm:$0xff]
    %v42 = vld [vmem:[%s2 + $0x18] sm:$0xff]
    %v43 = vld [vmem:[%s2 + $0x20] sm:$0xff]
    %v44 = vld [vmem:[%s2 + $0x28] sm:$0xff]
    %v45 = vld [vmem:[%s2 + $0x30] sm:$0xff]
    %v46 = vld [vmem:[%s2 + $0x38] sm:$0xff]
    %48 = vset.pattern.permute.xlu0 0
    %49 = vperm.xlu0 %48, %v39
    %v50 = vpop.permute.xlu0 %49
    %53 = vset.pattern.permute.xlu0 0
    %54 = vperm.xlu0 %53, %v40
    %v55 = vpop.permute.xlu0 %54
    %58 = vset.pattern.permute.xlu0 0
    %59 = vperm.xlu0 %58, %v41
    %v60 = vpop.permute.xlu0 %59
    %63 = vset.pattern.permute.xlu0 0
    %64 = vperm.xlu0 %63, %v42
    %v65 = vpop.permute.xlu0 %64
    %68 = vset.pattern.permute.xlu0 0
    %69 = vperm.xlu0 %68, %v43
    %v70 = vpop.permute.xlu0 %69
    %73 = vset.pattern.permute.xlu0 0
    %74 = vperm.xlu0 %73, %v44
    %v75 = vpop.permute.xlu0 %74
    %78 = vset.pattern.permute.xlu0 0
    %79 = vperm.xlu0 %78, %v45
    %v80 = vpop.permute.xlu0 %79
    %83 = vset.pattern.permute.xlu0 0
    %84 = vperm.xlu0 %83, %v46
    %v85 = vpop.permute.xlu0 %84
    %v95 = vunpack.c.l.b16 %v31
    %v96 = vunpack.c.l.b16 %v32
    %v97 = vunpack.c.l.b16 %v33
    %v98 = vunpack.c.l.b16 %v34
    %v99 = vunpack.c.l.b16 %v35
    %v100 = vunpack.c.l.b16 %v36
    %v101 = vunpack.c.l.b16 %v37
    %v102 = vunpack.c.l.b16 %v38
    %v103 = vpack.c.b16 %v96, %v95
    %v104 = vpack.c.b16 %v98, %v97
    %v105 = vpack.c.b16 %v100, %v99
    %v106 = vpack.c.b16 %v102, %v101
    %v109 = vunpack.c.l.b16 %v29
    %v110 = vunpack.c.l.b16 %v30
    %v111 = vpack.c.b16 %v110, %v109
    %vm113 = vcmask 130048
    %v115 = vsel %vm113, %v103, 0
    %v118 = vsel %vm113, %v104, 0
    %v121 = vsel %vm113, %v105, 0
    %v124 = vsel %vm113, %v106, 0
    %126 = vmatpush.bf16.msra.mxu0 0
    %127 = vmatpush.bf16.msra.mxu0 0
    %128 = vmatpush.bf16.msra.mxu0 0
    %129 = vmatpush.bf16.msra.mxu0 0
    %130 = vmatpush.bf16.msra.mxu0 0
    %131 = vmatpush.bf16.msra.mxu0 0
    %132 = vmatpush.bf16.msra.mxu0 0
    %133 = vmatpush.bf16.msra.mxu0 %v111
    %134 = vmatmul.bf16.gmra.mxu0 %v115
    %v135 = vpop.f32.mrf.mxu0
    %v136 = vadd.f32 %v50, %v135
    %v137 = vpop.f32.mrf.mxu0
    %v138 = vadd.f32 %v55, %v137
    %139 = vmatmul.bf16.gmra.mxu0 %v118
    %v140 = vpop.f32.mrf.mxu0
    %v141 = vadd.f32 %v60, %v140
    %v142 = vpop.f32.mrf.mxu0
    %v143 = vadd.f32 %v65, %v142
    %144 = vmatmul.bf16.gmra.mxu0 %v121
    %v145 = vpop.f32.mrf.mxu0
    %v146 = vadd.f32 %v70, %v145
    %v147 = vpop.f32.mrf.mxu0
    %v148 = vadd.f32 %v75, %v147
    %149 = vmatmul.bf16.gmra.mxu0 %v124
    %v150 = vpop.f32.mrf.mxu0
    %v151 = vadd.f32 %v80, %v150
    %v152 = vpop.f32.mrf.mxu0
    %v153 = vadd.f32 %v85, %v152
    %154 = vdwg.mxu0
    %v155 = vmax.f32 %v136, 0.0
    %v156 = vmax.f32 %v138, 0.0
    %v157 = vmax.f32 %v141, 0.0
    %v158 = vmax.f32 %v143, 0.0
    %v159 = vmax.f32 %v146, 0.0
    %v160 = vmax.f32 %v148, 0.0
    %v161 = vmax.f32 %v151, 0.0
    %v162 = vmax.f32 %v153, 0.0
    %v163 = vld [vmem:[%s3] sm:$0xf]
    %v164 = vld [vmem:[%s3 + $0x4] sm:$0xf]
    %v165 = vld [vmem:[%s3 + $0x8] sm:$0xf]
    %v166 = vld [vmem:[%s3 + $0xc] sm:$0xf]
    %v167 = vpack.c.bf16 %v156, %v155
    %v168 = vpack.c.bf16 %v158, %v157
    %v169 = vpack.c.bf16 %v160, %v159
    %v170 = vpack.c.bf16 %v162, %v161
    %v171 = vld [vmem:[%s4] sm:$0xff]
    %v172 = vld [vmem:[%s4 + $0x8] sm:$0xff]
    %v173 = vld [vmem:[%s4 + $0x10] sm:$0xff]
    %v174 = vld [vmem:[%s4 + $0x18] sm:$0xff]
    %176 = vset.pattern.permute.xlu0 0
    %177 = vperm.xlu0 %176, %v171
    %v178 = vpop.permute.xlu0 %177
    %181 = vset.pattern.permute.xlu0 0
    %182 = vperm.xlu0 %181, %v172
    %v183 = vpop.permute.xlu0 %182
    %186 = vset.pattern.permute.xlu0 0
    %187 = vperm.xlu0 %186, %v173
    %v188 = vpop.permute.xlu0 %187
    %191 = vset.pattern.permute.xlu0 0
    %192 = vperm.xlu0 %191, %v174
    %v193 = vpop.permute.xlu0 %192
    %v199 = vunpack.c.l.b16 %v163
    %v200 = vunpack.c.l.b16 %v164
    %v201 = vunpack.c.l.b16 %v165
    %v202 = vunpack.c.l.b16 %v166
    %v203 = vpack.c.b16 %v200, %v199
    %v204 = vpack.c.b16 %v202, %v201
    %vm205 = vcmask 523264
    %v207 = vsel %vm205, %v203, 0
    %v210 = vsel %vm205, %v204, 0
    %212 = vmatpush.bf16.msra.mxu0 0
    %213 = vmatpush.bf16.msra.mxu0 0
    %214 = vmatpush.bf16.msra.mxu0 0
    %215 = vmatpush.bf16.msra.mxu0 0
    %216 = vmatpush.bf16.msra.mxu0 %v170
    %217 = vmatpush.bf16.msra.mxu0 %v169
    %218 = vmatpush.bf16.msra.mxu0 %v168
    %219 = vmatpush.bf16.msra.mxu0 %v167
    %220 = vmatmul.bf16.gmra.mxu0 %v207
    %v221 = vpop.f32.mrf.mxu0
    %v222 = vadd.f32 %v178, %v221
    %v223 = vpop.f32.mrf.mxu0
    %v224 = vadd.f32 %v183, %v223
    %225 = vmatmul.bf16.gmra.mxu0 %v210
    %v226 = vpop.f32.mrf.mxu0
    %v227 = vadd.f32 %v188, %v226
    %v228 = vpop.f32.mrf.mxu0
    %v229 = vadd.f32 %v193, %v228
    %230 = vdwg.mxu0
    %v231 = vmax.f32 %v222, 0.0
    %v232 = vmax.f32 %v224, 0.0
    %v233 = vmax.f32 %v227, 0.0
    %v234 = vmax.f32 %v229, 0.0
    %v235 = vld [vmem:[%s5] sm:$0xff]
    %v236 = vld [vmem:[%s5 + $0x8] sm:$0xff]
    %v237 = vld [vmem:[%s5 + $0x10] sm:$0xff]
    %v238 = vld [vmem:[%s5 + $0x18] sm:$0xff]
    %240 = vset.pattern.permute.xlu0 0
    %241 = vperm.xlu0 %240, %v235
    %v242 = vpop.permute.xlu0 %241
    %245 = vset.pattern.permute.xlu0 0
    %246 = vperm.xlu0 %245, %v236
    %v247 = vpop.permute.xlu0 %246
    %250 = vset.pattern.permute.xlu0 0
    %251 = vperm.xlu0 %250, %v237
    %v252 = vpop.permute.xlu0 %251
    %255 = vset.pattern.permute.xlu0 0
    %256 = vperm.xlu0 %255, %v238
    %v257 = vpop.permute.xlu0 %256
    %v259 = vmul.f32 %v231, %v242
    %v260 = vmul.f32 %v232, %v247
    %v261 = vmul.f32 %v233, %v252
    %v262 = vmul.f32 %v234, %v257
    %vm263 = vcmask 64512
    %v264 = vsel %vm263, %v259, 0.0
    %v265 = vsel %vm263, %v260, 0.0
    %v266 = vadd.f32 %v264, %v265
    %v267 = vsel %vm263, %v261, 0.0
    %v268 = vadd.f32 %v266, %v267
    %v269 = vsel %vm263, %v262, 0.0
    %v270 = vadd.f32 %v268, %v269
    %v271 = vrot.slane %v270, 4
    %v272 = vadd.f32 %v270, %v271
    %v273 = vrot.slane %v272, 2
    %v274 = vadd.f32 %v272, %v273
    %v275 = vrot.slane %v274, 1
    %v276 = vadd.f32 %v274, %v275
    %s277 = sld [smem:[#allocation2]]
    %v278 = vstv %s277
    %v279 = vadd.f32 %v276, %v278
    %v280 = vxor.u32 %v279, 2147483648
    %v281 = vmul.f32 %v280, 1.442695
    %v282 = vpow.pop %v281
    %v283 = vadd.f32 %v282, 1.0
    %v284 = vrcp.pop %v283
    %v285 = vmul.f32 %v283, %v284
    %v286 = vsub.f32 1.0, %v285
    %v287 = vmul.f32 %v284, %v286
    %v288 = vadd.f32 %v284, %v287
    %vm289 = vweird.f32 %v283
    %vm290 = vweird.f32 %v284
    %vm291 = vmor %vm289, %vm290
    %v292 = vsel %vm291, %v284, %v288
    %v293 = vand.u32 2147483647, %v283
    %vm294 = vcmp.eq.f32.partialorder %v293, 8.507059e+37
    %v295 = vand.u32 %v283, 2147483648
    %v296 = vor.u32 1.1754944e-38, %v295
    %v297 = vsel %vm294, %v296, %v292
    %v298 = vmul.f32 1.0, %v297
    %vm299 = vcmask 57344
    %300 = vst.msk [vmem:[#allocation3] sm:$0x1] %vm299, %v298
    // Predicated region
    $region30: #{network_forward_xt.1} parent=1 // pred_check
      _
    $region31: #{network_forward_xt.1} parent=1 // pred_check_branch
      %302 = sbr.rel (0) target = $region33
    $region32: #{network_forward_xt.1} parent=1 // pred_region
      %304 = vsyncadd [#allocation4], 0
      %s306 = sshll.u32 [#allocation3], 4
      %s307 = int_to_ptr.vmem [resolvable:$true] %s306
      %s308 = sshll.u32 %s7, 4
      %s309 = int_to_ptr.hbm [resolvable:$true] %s308
      %311 = dma.vmem_to_hbm [thread:$0]  %s307, 16, %s309, [#allocation4]
    $region33: #{network_forward_xt.1} parent=1 // pred_fallthru
      _
    // Predicated region
    $region34: #{network_forward_xt.1} parent=1 // pred_check
      _
    $region35: #{network_forward_xt.1} parent=1 // pred_check_branch
      %313 = sbr.rel (0) target = $region37
    $region36: #{network_forward_xt.1} parent=1 // pred_region
      %315 = dma.done [#allocation4], 16
    $region37: #{network_forward_xt.1} parent=1 // pred_fallthru
      _
    %316 = vsyncpa [#allocation4], 1

</llo_original>
